<compile_context>
chip_gen: v6e
topology: v6e:2x2x1
jax: 0.10.0
libtpu: 0.0.40
codegen_flags: <defaults>
</compile_context>

<pallas_src>
import functools

import jax
import jax.numpy as jnp
import numpy as np
from jax.experimental import pallas as pl
from jax.experimental.pallas import tpu as pltpu


def _spatial_attention_kernel(w_ref, x_ref, o_ref, mmax_ref, pad_ref, *,
                              H, W, K, P, lane_aligned):
    """Grid = (batch, C-chunk).  One image's output block is resident across C.

    w_ref    : (K*K,) f32 in SMEM              -- flattened conv weight (row-major)
    x_ref    : (1, C_TILE, H, W) in VMEM       -- one channel chunk of one image
    o_ref    : (1, 1, H, W) in VMEM            -- resident across the C axis
    mmax_ref : (H, W) f32 VMEM scratch         -- running channel max
    pad_ref  : (H+2P, W[+2P]) f32 VMEM scratch -- zero-padded channel-max plane
    """
    c = pl.program_id(1)
    last_c = pl.num_programs(1) - 1

    # ---- running channel max over this C chunk (single VALU reduction) ----
    chunk_max = jnp.max(x_ref[0], axis=0).astype(jnp.float32)        # (H, W)

    @pl.when(c == 0)
    def _():
        mmax_ref[...] = chunk_max

    @pl.when(c != 0)
    def _():
        mmax_ref[...] = jnp.maximum(mmax_ref[...], chunk_max)

    # ---- finalize only at the last C chunk: zero-pad, conv, sigmoid, store --
    @pl.when(c == last_c)
    def _():
        m = mmax_ref[...]                                             # (H, W) f32

        # All K*K scalar weights: one SMEM read each, hoisted out of tap loops.
        wv = [w_ref[t] for t in range(K * K)]

        if lane_aligned:
            # Row-only padded plane (stored at lane offset 0); column shifts via
            # pltpu.roll on the XLU slot + hoisted iota lane masks (VALU selects),
            # so no lane-offset slices / masked vld-vst on the load/store slots.
            pad_ref[0:P, :] = jnp.zeros((P, W), jnp.float32)
            pad_ref[P + H:, :] = jnp.zeros((P, W), jnp.float32)
            pad_ref[P:P + H, :] = m
            plane = pad_ref[...]                                      # (H+2P, W)
            lane = jax.lax.broadcasted_iota(jnp.int32, (H + 2 * P, W), 1)
            cols = []
            for dj in range(K):
                d = dj - P
                rolled = plane if d == 0 else pltpu.roll(plane, (-d) % W, axis=1)
                if d > 0:
                    cols.append(jnp.where(lane < (W - d), rolled, 0.0))
                elif d < 0:
                    cols.append(jnp.where(lane >= (-d), rolled, 0.0))
                else:
                    cols.append(rolled)
        else:
            # Small / non-128-multiple W: (H+2P, W+2P) padded scratch.  Refresh
            # only the P-wide border strips, then write the interior.
            zrow = jnp.zeros((P, W + 2 * P), jnp.float32)
            zcol = jnp.zeros((H, P), jnp.float32)
            pad_ref[0:P, :] = zrow
            pad_ref[P + H:2 * P + H, :] = zrow
            pad_ref[P:P + H, 0:P] = zcol
            pad_ref[P:P + H, P + W:2 * P + W] = zcol
            pad_ref[P:P + H, P:P + W] = m
            # K column-shifted planes, loaded once, reused across all row taps.
            cols = [pad_ref[:, dj:dj + W] for dj in range(K)]         # (H+2P, W)

        # Factorized KxK accumulation:
        #   acc[i, j] = sum_di sum_dj w[di, dj] * m_zeropad[i+di-P, j+dj-P]
        acc = jnp.zeros((H, W), jnp.float32)
        for di in range(K):
            rp = cols[0] * wv[di * K]
            for dj in range(1, K):
                rp = rp + cols[dj] * wv[di * K + dj]                  # VALU mul+add
            acc = acc + rp[di:di + H, :]                              # one sublane shift / row tap

        o_ref[0, 0] = jax.nn.sigmoid(acc).astype(o_ref.dtype)         # EUP + store


def spatial_attention(x, w, *, c_tile=None, vmem_limit_bytes=None):
    """x: (N, C, H, W) f32/bf16.  w: (1, 1, K, K) conv weight, K in {3, 7}."""
    N, C, H, W = x.shape
    K = w.shape[-1]
    assert K in (3, 7), "kernel size must be 3 or 7"
    P = (K - 1) // 2

    lane_aligned = (W % 128 == 0)
    w_pad = W if lane_aligned else W + 2 * P
    itemsize = x.dtype.itemsize

    # ---- channel tile: largest divisor of C whose input block stays small
    # enough that double-buffering fits comfortably on every generation
    # (budget re-derived for v7x's 64 MiB VMEM: ~4 MiB per pipelined block). --
    if c_tile is None:
        block_budget = 4 << 20
        cap = max(1, block_budget // max(1, H * W * itemsize))
        c_tile = 1
        for d in range(1, C + 1):
            if C % d == 0 and d <= cap:
                c_tile = d
    assert C % c_tile == 0, "c_tile must divide C (partial max blocks would be wrong)"
    n_c = C // c_tile

    # ---- explicit VMEM cap with headroom (scoped defaults are 16/32 MiB) ----
    if vmem_limit_bytes is None:
        in_block = c_tile * H * W * itemsize
        out_block = H * W * itemsize
        scratch = (H * W + (H + 2 * P) * w_pad) * 4
        temps = (K + 4) * (H + 2 * P) * max(W, w_pad) * 4    # cols / rp / acc / m
        vmem_limit_bytes = int(min(
            100 << 20,
            max(32 << 20,
                2 * in_block + 2 * out_block + scratch + temps + (8 << 20))))

    w_flat = w.reshape(-1).astype(jnp.float32)
    kernel = functools.partial(_spatial_attention_kernel,
                               H=H, W=W, K=K, P=P, lane_aligned=lane_aligned)

    cost = pl.CostEstimate(
        flops=int(N * H * W * (C + 2 * K * K)),
        transcendentals=int(N * H * W),                       # sigmoid
        bytes_accessed=int(N * C * H * W * itemsize           # read x
                           + N * H * W * itemsize             # write out
                           + K * K * 4),                      # weights
    )

    return pl.pallas_call(
        kernel,
        out_shape=jax.ShapeDtypeStruct((N, 1, H, W), x.dtype),
        grid=(N, n_c),
        in_specs=[
            # conv weights: small, scalar-indexed -> whole array in SMEM
            pl.BlockSpec(memory_space=pltpu.MemorySpace.SMEM),
            # input: one (C_TILE, H, W) chunk per step; C is innermost/arbitrary.
            pl.BlockSpec((1, c_tile, H, W), lambda b, c: (b, c, 0, 0)),
        ],
        # Same output block across the C axis -> resident block, written once
        # at the last chunk (accumulator pattern).
        out_specs=pl.BlockSpec((1, 1, H, W), lambda b, c: (b, 0, 0, 0)),
        scratch_shapes=[
            pltpu.VMEM((H, W), jnp.float32),                  # running channel max
            pltpu.VMEM((H + 2 * P, w_pad), jnp.float32),      # zero-padded plane
        ],
        compiler_params=pltpu.CompilerParams(
            dimension_semantics=("parallel", "arbitrary"),
            vmem_limit_bytes=vmem_limit_bytes,
        ),
        cost_estimate=cost,
    )(w_flat, x)


def _reference(x, w):
    """Pure-JAX reference mirroring the PyTorch module."""
    K = w.shape[-1]
    P = (K - 1) // 2
    m = jnp.max(x, axis=1, keepdims=True)
    y = jax.lax.conv_general_dilated(
        m, w, window_strides=(1, 1), padding=[(P, P), (P, P)],
        dimension_numbers=("NCHW", "OIHW", "NCHW"),
    )
    return jax.nn.sigmoid(y)


if __name__ == "__main__":
    # Small, deterministic inputs consistent with the module's forward.
    N, C, H, W = 2, 4, 16, 16
    K = 7

    key = jax.random.PRNGKey(0)
    kx, kw = jax.random.split(key)
    x = jax.random.normal(kx, (N, C, H, W), dtype=jnp.float32)

    # Deterministic weight init (synthetic; mimics PyTorch's uniform fan-in bound).
    fan_in = 1 * K * K
    bound = 1.0 / np.sqrt(fan_in)
    w = jax.random.uniform(kw, (1, 1, K, K), dtype=jnp.float32,
                           minval=-bound, maxval=bound)

    # c_tile=2 exercises the multi-chunk running-max accumulation path.
    out = jax.block_until_ready(spatial_attention(x, w, c_tile=2))
    ref = jax.block_until_ready(_reference(x, w))
    np.testing.assert_allclose(np.asarray(out), np.asarray(ref),
                               rtol=1e-5, atol=1e-5)

    print("KERNEL_OK")
</pallas_src>

<mosaic_0001>
module attributes {stable_mosaic.version = 11 : i64} {
  func.func @_spatial_attention_kernel(%arg0: i32, %arg1: i32, %arg2: memref<49xf32, #tpu.memory_space<smem>>, %arg3: memref<1x2x16x16xf32, #tpu.memory_space<vmem>>, %arg4: memref<1x1x16x16xf32, #tpu.memory_space<vmem>>, %arg5: memref<16x16xf32, #tpu.memory_space<vmem>>, %arg6: memref<22x22xf32, #tpu.memory_space<vmem>>) attributes {dimension_semantics = [#tpu.dimension_semantics<parallel>, #tpu.dimension_semantics<arbitrary>], iteration_bounds = array<i64: 2, 2>, scalar_prefetch = 0 : i64, scratch_operands = 2 : i64, tpu.core_type = #tpu.core_type<tc>, window_params = [{transform_indices = @transform_0, window_bounds = array<i64: 49>}, {transform_indices = @transform_1, window_bounds = array<i64: 1, 2, 16, 16>}, {transform_indices = @transform_2, window_bounds = array<i64: 1, 1, 16, 16>}]} {
    %c0 = arith.constant 0 : index
    %c0_0 = arith.constant 0 : index
    %c0_1 = arith.constant 0 : index
    %c0_2 = arith.constant 0 : index
    %0 = vector.load %arg3[%c0, %c0_0, %c0_1, %c0_2] : memref<1x2x16x16xf32, #tpu.memory_space<vmem>>, vector<1x2x16x16xf32>
    %1 = vector.shape_cast %0 : vector<1x2x16x16xf32> to vector<2x16x16xf32>
    %cst = arith.constant dense<0xFF800000> : vector<16x16xf32>
    %2 = vector.multi_reduction <maximumf>, %1, %cst [0] : vector<2x16x16xf32> to vector<16x16xf32>
    %c0_i32 = arith.constant 0 : i32
    %3 = arith.cmpi eq, %arg1, %c0_i32 : i32
    %4 = arith.extui %3 : i1 to i32
    %c0_i32_3 = arith.constant 0 : i32
    %5 = arith.cmpi ne, %4, %c0_i32_3 : i32
    scf.if %5 {
      %c0_7 = arith.constant 0 : index
      %c0_8 = arith.constant 0 : index
      %12 = vector.load %arg5[%c0_7, %c0_8] : memref<16x16xf32, #tpu.memory_space<vmem>>, vector<16x16xf32>
      tpu.vector_store %arg5[%c0_7, %c0_8], %2 {strides = array<i32>} : memref<16x16xf32, #tpu.memory_space<vmem>>, vector<16x16xf32>,
    } else {
    }
    %c0_i32_4 = arith.constant 0 : i32
    %6 = arith.cmpi ne, %arg1, %c0_i32_4 : i32
    %7 = arith.extui %6 : i1 to i32
    %c0_i32_5 = arith.constant 0 : i32
    %8 = arith.cmpi ne, %7, %c0_i32_5 : i32
    scf.if %8 {
      %c0_7 = arith.constant 0 : index
      %c0_8 = arith.constant 0 : index
      %12 = vector.load %arg5[%c0_7, %c0_8] : memref<16x16xf32, #tpu.memory_space<vmem>>, vector<16x16xf32>
      %13 = arith.maximumf %12, %2 : vector<16x16xf32>
      %c0_9 = arith.constant 0 : index
      %c0_10 = arith.constant 0 : index
      %14 = vector.load %arg5[%c0_9, %c0_10] : memref<16x16xf32, #tpu.memory_space<vmem>>, vector<16x16xf32>
      tpu.vector_store %arg5[%c0_9, %c0_10], %13 {strides = array<i32>} : memref<16x16xf32, #tpu.memory_space<vmem>>, vector<16x16xf32>,
    } else {
    }
    %c1_i32 = arith.constant 1 : i32
    %9 = arith.cmpi eq, %arg1, %c1_i32 : i32
    %10 = arith.extui %9 : i1 to i32
    %c0_i32_6 = arith.constant 0 : i32
    %11 = arith.cmpi ne, %10, %c0_i32_6 : i32
    scf.if %11 {
      %c0_7 = arith.constant 0 : index
      %c0_8 = arith.constant 0 : index
      %12 = vector.load %arg5[%c0_7, %c0_8] : memref<16x16xf32, #tpu.memory_space<vmem>>, vector<16x16xf32>
      %c0_9 = arith.constant 0 : index
      %13 = memref.load %arg2[%c0_9] : memref<49xf32, #tpu.memory_space<smem>>
      %c1 = arith.constant 1 : index
      %14 = memref.load %arg2[%c1] : memref<49xf32, #tpu.memory_space<smem>>
      %c2 = arith.constant 2 : index
      %15 = memref.load %arg2[%c2] : memref<49xf32, #tpu.memory_space<smem>>
      %c3 = arith.constant 3 : index
      %16 = memref.load %arg2[%c3] : memref<49xf32, #tpu.memory_space<smem>>
      %c4 = arith.constant 4 : index
      %17 = memref.load %arg2[%c4] : memref<49xf32, #tpu.memory_space<smem>>
      %c5 = arith.constant 5 : index
      %18 = memref.load %arg2[%c5] : memref<49xf32, #tpu.memory_space<smem>>
      %c6 = arith.constant 6 : index
      %19 = memref.load %arg2[%c6] : memref<49xf32, #tpu.memory_space<smem>>
      %c7 = arith.constant 7 : index
      %20 = memref.load %arg2[%c7] : memref<49xf32, #tpu.memory_space<smem>>
      %c8 = arith.constant 8 : index
      %21 = memref.load %arg2[%c8] : memref<49xf32, #tpu.memory_space<smem>>
      %c9 = arith.constant 9 : index
      %22 = memref.load %arg2[%c9] : memref<49xf32, #tpu.memory_space<smem>>
      %c10 = arith.constant 10 : index
      %23 = memref.load %arg2[%c10] : memref<49xf32, #tpu.memory_space<smem>>
      %c11 = arith.constant 11 : index
      %24 = memref.load %arg2[%c11] : memref<49xf32, #tpu.memory_space<smem>>
      %c12 = arith.constant 12 : index
      %25 = memref.load %arg2[%c12] : memref<49xf32, #tpu.memory_space<smem>>
      %c13 = arith.constant 13 : index
      %26 = memref.load %arg2[%c13] : memref<49xf32, #tpu.memory_space<smem>>
      %c14 = arith.constant 14 : index
      %27 = memref.load %arg2[%c14] : memref<49xf32, #tpu.memory_space<smem>>
      %c15 = arith.constant 15 : index
      %28 = memref.load %arg2[%c15] : memref<49xf32, #tpu.memory_space<smem>>
      %c16 = arith.constant 16 : index
      %29 = memref.load %arg2[%c16] : memref<49xf32, #tpu.memory_space<smem>>
      %c17 = arith.constant 17 : index
      %30 = memref.load %arg2[%c17] : memref<49xf32, #tpu.memory_space<smem>>
      %c18 = arith.constant 18 : index
      %31 = memref.load %arg2[%c18] : memref<49xf32, #tpu.memory_space<smem>>
      %c19 = arith.constant 19 : index
      %32 = memref.load %arg2[%c19] : memref<49xf32, #tpu.memory_space<smem>>
      %c20 = arith.constant 20 : index
      %33 = memref.load %arg2[%c20] : memref<49xf32, #tpu.memory_space<smem>>
      %c21 = arith.constant 21 : index
      %34 = memref.load %arg2[%c21] : memref<49xf32, #tpu.memory_space<smem>>
      %c22 = arith.constant 22 : index
      %35 = memref.load %arg2[%c22] : memref<49xf32, #tpu.memory_space<smem>>
      %c23 = arith.constant 23 : index
      %36 = memref.load %arg2[%c23] : memref<49xf32, #tpu.memory_space<smem>>
      %c24 = arith.constant 24 : index
      %37 = memref.load %arg2[%c24] : memref<49xf32, #tpu.memory_space<smem>>
      %c25 = arith.constant 25 : index
      %38 = memref.load %arg2[%c25] : memref<49xf32, #tpu.memory_space<smem>>
      %c26 = arith.constant 26 : index
      %39 = memref.load %arg2[%c26] : memref<49xf32, #tpu.memory_space<smem>>
      %c27 = arith.constant 27 : index
      %40 = memref.load %arg2[%c27] : memref<49xf32, #tpu.memory_space<smem>>
      %c28 = arith.constant 28 : index
      %41 = memref.load %arg2[%c28] : memref<49xf32, #tpu.memory_space<smem>>
      %c29 = arith.constant 29 : index
      %42 = memref.load %arg2[%c29] : memref<49xf32, #tpu.memory_space<smem>>
      %c30 = arith.constant 30 : index
      %43 = memref.load %arg2[%c30] : memref<49xf32, #tpu.memory_space<smem>>
      %c31 = arith.constant 31 : index
      %44 = memref.load %arg2[%c31] : memref<49xf32, #tpu.memory_space<smem>>
      %c32 = arith.constant 32 : index
      %45 = memref.load %arg2[%c32] : memref<49xf32, #tpu.memory_space<smem>>
      %c33 = arith.constant 33 : index
      %46 = memref.load %arg2[%c33] : memref<49xf32, #tpu.memory_space<smem>>
      %c34 = arith.constant 34 : index
      %47 = memref.load %arg2[%c34] : memref<49xf32, #tpu.memory_space<smem>>
      %c35 = arith.constant 35 : index
      %48 = memref.load %arg2[%c35] : memref<49xf32, #tpu.memory_space<smem>>
      %c36 = arith.constant 36 : index
      %49 = memref.load %arg2[%c36] : memref<49xf32, #tpu.memory_space<smem>>
      %c37 = arith.constant 37 : index
      %50 = memref.load %arg2[%c37] : memref<49xf32, #tpu.memory_space<smem>>
      %c38 = arith.constant 38 : index
      %51 = memref.load %arg2[%c38] : memref<49xf32, #tpu.memory_space<smem>>
      %c39 = arith.constant 39 : index
      %52 = memref.load %arg2[%c39] : memref<49xf32, #tpu.memory_space<smem>>
      %c40 = arith.constant 40 : index
      %53 = memref.load %arg2[%c40] : memref<49xf32, #tpu.memory_space<smem>>
      %c41 = arith.constant 41 : index
      %54 = memref.load %arg2[%c41] : memref<49xf32, #tpu.memory_space<smem>>
      %c42 = arith.constant 42 : index
      %55 = memref.load %arg2[%c42] : memref<49xf32, #tpu.memory_space<smem>>
      %c43 = arith.constant 43 : index
      %56 = memref.load %arg2[%c43] : memref<49xf32, #tpu.memory_space<smem>>
      %c44 = arith.constant 44 : index
      %57 = memref.load %arg2[%c44] : memref<49xf32, #tpu.memory_space<smem>>
      %c45 = arith.constant 45 : index
      %58 = memref.load %arg2[%c45] : memref<49xf32, #tpu.memory_space<smem>>
      %c46 = arith.constant 46 : index
      %59 = memref.load %arg2[%c46] : memref<49xf32, #tpu.memory_space<smem>>
      %c47 = arith.constant 47 : index
      %60 = memref.load %arg2[%c47] : memref<49xf32, #tpu.memory_space<smem>>
      %c48 = arith.constant 48 : index
      %61 = memref.load %arg2[%c48] : memref<49xf32, #tpu.memory_space<smem>>
      %cst_10 = arith.constant 0.000000e+00 : f32
      %62 = vector.broadcast %cst_10 : f32 to vector<3x22xf32>
      %cst_11 = arith.constant 0.000000e+00 : f32
      %63 = vector.broadcast %cst_11 : f32 to vector<16x3xf32>
      %c0_12 = arith.constant 0 : index
      %c0_13 = arith.constant 0 : index
      %64 = vector.load %arg6[%c0_12, %c0_13] : memref<22x22xf32, #tpu.memory_space<vmem>>, vector<3x22xf32>
      tpu.vector_store %arg6[%c0_12, %c0_13], %62 {strides = array<i32>} : memref<22x22xf32, #tpu.memory_space<vmem>>, vector<3x22xf32>,
      %c19_14 = arith.constant 19 : index
      %c0_15 = arith.constant 0 : index
      %65 = vector.load %arg6[%c19_14, %c0_15] : memref<22x22xf32, #tpu.memory_space<vmem>>, vector<3x22xf32>
      tpu.vector_store %arg6[%c19_14, %c0_15], %62 {strides = array<i32>} : memref<22x22xf32, #tpu.memory_space<vmem>>, vector<3x22xf32>,
      %c3_16 = arith.constant 3 : index
      %c0_17 = arith.constant 0 : index
      %66 = vector.load %arg6[%c3_16, %c0_17] : memref<22x22xf32, #tpu.memory_space<vmem>>, vector<16x3xf32>
      tpu.vector_store %arg6[%c3_16, %c0_17], %63 {strides = array<i32>} : memref<22x22xf32, #tpu.memory_space<vmem>>, vector<16x3xf32>,
      %c3_18 = arith.constant 3 : index
      %c19_19 = arith.constant 19 : index
      %67 = vector.load %arg6[%c3_18, %c19_19] : memref<22x22xf32, #tpu.memory_space<vmem>>, vector<16x3xf32>
      tpu.vector_store %arg6[%c3_18, %c19_19], %63 {strides = array<i32>} : memref<22x22xf32, #tpu.memory_space<vmem>>, vector<16x3xf32>,
      %c3_20 = arith.constant 3 : index
      %c3_21 = arith.constant 3 : index
      %68 = vector.load %arg6[%c3_20, %c3_21] : memref<22x22xf32, #tpu.memory_space<vmem>>, vector<16x16xf32>
      tpu.vector_store %arg6[%c3_20, %c3_21], %12 {strides = array<i32>} : memref<22x22xf32, #tpu.memory_space<vmem>>, vector<16x16xf32>,
      %c0_22 = arith.constant 0 : index
      %c0_23 = arith.constant 0 : index
      %69 = vector.load %arg6[%c0_22, %c0_23] : memref<22x22xf32, #tpu.memory_space<vmem>>, vector<22x16xf32>
      %c0_24 = arith.constant 0 : index
      %c1_25 = arith.constant 1 : index
      %70 = vector.load %arg6[%c0_24, %c1_25] : memref<22x22xf32, #tpu.memory_space<vmem>>, vector<22x16xf32>
      %c0_26 = arith.constant 0 : index
      %c2_27 = arith.constant 2 : index
      %71 = vector.load %arg6[%c0_26, %c2_27] : memref<22x22xf32, #tpu.memory_space<vmem>>, vector<22x16xf32>
      %c0_28 = arith.constant 0 : index
      %c3_29 = arith.constant 3 : index
      %72 = vector.load %arg6[%c0_28, %c3_29] : memref<22x22xf32, #tpu.memory_space<vmem>>, vector<22x16xf32>
      %c0_30 = arith.constant 0 : index
      %c4_31 = arith.constant 4 : index
      %73 = vector.load %arg6[%c0_30, %c4_31] : memref<22x22xf32, #tpu.memory_space<vmem>>, vector<22x16xf32>
      %c0_32 = arith.constant 0 : index
      %c5_33 = arith.constant 5 : index
      %74 = vector.load %arg6[%c0_32, %c5_33] : memref<22x22xf32, #tpu.memory_space<vmem>>, vector<22x16xf32>
      %c0_34 = arith.constant 0 : index
      %c6_35 = arith.constant 6 : index
      %75 = vector.load %arg6[%c0_34, %c6_35] : memref<22x22xf32, #tpu.memory_space<vmem>>, vector<22x16xf32>
      %cst_36 = arith.constant 0.000000e+00 : f32
      %76 = vector.broadcast %cst_36 : f32 to vector<16x16xf32>
      %77 = vector.broadcast %13 : f32 to vector<22x16xf32>
      %78 = arith.mulf %69, %77 : vector<22x16xf32>
      %79 = vector.broadcast %14 : f32 to vector<22x16xf32>
      %80 = arith.mulf %70, %79 : vector<22x16xf32>
      %81 = arith.addf %78, %80 : vector<22x16xf32>
      %82 = vector.broadcast %15 : f32 to vector<22x16xf32>
      %83 = arith.mulf %71, %82 : vector<22x16xf32>
      %84 = arith.addf %81, %83 : vector<22x16xf32>
      %85 = vector.broadcast %16 : f32 to vector<22x16xf32>
      %86 = arith.mulf %72, %85 : vector<22x16xf32>
      %87 = arith.addf %84, %86 : vector<22x16xf32>
      %88 = vector.broadcast %17 : f32 to vector<22x16xf32>
      %89 = arith.mulf %73, %88 : vector<22x16xf32>
      %90 = arith.addf %87, %89 : vector<22x16xf32>
      %91 = vector.broadcast %18 : f32 to vector<22x16xf32>
      %92 = arith.mulf %74, %91 : vector<22x16xf32>
      %93 = arith.addf %90, %92 : vector<22x16xf32>
      %94 = vector.broadcast %19 : f32 to vector<22x16xf32>
      %95 = arith.mulf %75, %94 : vector<22x16xf32>
      %96 = arith.addf %93, %95 : vector<22x16xf32>
      %97 = vector.extract_strided_slice %96 {offsets = [0, 0], sizes = [16, 16], strides = [1, 1]} : vector<22x16xf32> to vector<16x16xf32>
      %98 = arith.addf %76, %97 : vector<16x16xf32>
      %99 = vector.broadcast %20 : f32 to vector<22x16xf32>
      %100 = arith.mulf %69, %99 : vector<22x16xf32>
      %101 = vector.broadcast %21 : f32 to vector<22x16xf32>
      %102 = arith.mulf %70, %101 : vector<22x16xf32>
      %103 = arith.addf %100, %102 : vector<22x16xf32>
      %104 = vector.broadcast %22 : f32 to vector<22x16xf32>
      %105 = arith.mulf %71, %104 : vector<22x16xf32>
      %106 = arith.addf %103, %105 : vector<22x16xf32>
      %107 = vector.broadcast %23 : f32 to vector<22x16xf32>
      %108 = arith.mulf %72, %107 : vector<22x16xf32>
      %109 = arith.addf %106, %108 : vector<22x16xf32>
      %110 = vector.broadcast %24 : f32 to vector<22x16xf32>
      %111 = arith.mulf %73, %110 : vector<22x16xf32>
      %112 = arith.addf %109, %111 : vector<22x16xf32>
      %113 = vector.broadcast %25 : f32 to vector<22x16xf32>
      %114 = arith.mulf %74, %113 : vector<22x16xf32>
      %115 = arith.addf %112, %114 : vector<22x16xf32>
      %116 = vector.broadcast %26 : f32 to vector<22x16xf32>
      %117 = arith.mulf %75, %116 : vector<22x16xf32>
      %118 = arith.addf %115, %117 : vector<22x16xf32>
      %119 = vector.extract_strided_slice %118 {offsets = [1, 0], sizes = [16, 16], strides = [1, 1]} : vector<22x16xf32> to vector<16x16xf32>
      %120 = arith.addf %98, %119 : vector<16x16xf32>
      %121 = vector.broadcast %27 : f32 to vector<22x16xf32>
      %122 = arith.mulf %69, %121 : vector<22x16xf32>
      %123 = vector.broadcast %28 : f32 to vector<22x16xf32>
      %124 = arith.mulf %70, %123 : vector<22x16xf32>
      %125 = arith.addf %122, %124 : vector<22x16xf32>
      %126 = vector.broadcast %29 : f32 to vector<22x16xf32>
      %127 = arith.mulf %71, %126 : vector<22x16xf32>
      %128 = arith.addf %125, %127 : vector<22x16xf32>
      %129 = vector.broadcast %30 : f32 to vector<22x16xf32>
      %130 = arith.mulf %72, %129 : vector<22x16xf32>
      %131 = arith.addf %128, %130 : vector<22x16xf32>
      %132 = vector.broadcast %31 : f32 to vector<22x16xf32>
      %133 = arith.mulf %73, %132 : vector<22x16xf32>
      %134 = arith.addf %131, %133 : vector<22x16xf32>
      %135 = vector.broadcast %32 : f32 to vector<22x16xf32>
      %136 = arith.mulf %74, %135 : vector<22x16xf32>
      %137 = arith.addf %134, %136 : vector<22x16xf32>
      %138 = vector.broadcast %33 : f32 to vector<22x16xf32>
      %139 = arith.mulf %75, %138 : vector<22x16xf32>
      %140 = arith.addf %137, %139 : vector<22x16xf32>
      %141 = vector.extract_strided_slice %140 {offsets = [2, 0], sizes = [16, 16], strides = [1, 1]} : vector<22x16xf32> to vector<16x16xf32>
      %142 = arith.addf %120, %141 : vector<16x16xf32>
      %143 = vector.broadcast %34 : f32 to vector<22x16xf32>
      %144 = arith.mulf %69, %143 : vector<22x16xf32>
      %145 = vector.broadcast %35 : f32 to vector<22x16xf32>
      %146 = arith.mulf %70, %145 : vector<22x16xf32>
      %147 = arith.addf %144, %146 : vector<22x16xf32>
      %148 = vector.broadcast %36 : f32 to vector<22x16xf32>
      %149 = arith.mulf %71, %148 : vector<22x16xf32>
      %150 = arith.addf %147, %149 : vector<22x16xf32>
      %151 = vector.broadcast %37 : f32 to vector<22x16xf32>
      %152 = arith.mulf %72, %151 : vector<22x16xf32>
      %153 = arith.addf %150, %152 : vector<22x16xf32>
      %154 = vector.broadcast %38 : f32 to vector<22x16xf32>
      %155 = arith.mulf %73, %154 : vector<22x16xf32>
      %156 = arith.addf %153, %155 : vector<22x16xf32>
      %157 = vector.broadcast %39 : f32 to vector<22x16xf32>
      %158 = arith.mulf %74, %157 : vector<22x16xf32>
      %159 = arith.addf %156, %158 : vector<22x16xf32>
      %160 = vector.broadcast %40 : f32 to vector<22x16xf32>
      %161 = arith.mulf %75, %160 : vector<22x16xf32>
      %162 = arith.addf %159, %161 : vector<22x16xf32>
      %163 = vector.extract_strided_slice %162 {offsets = [3, 0], sizes = [16, 16], strides = [1, 1]} : vector<22x16xf32> to vector<16x16xf32>
      %164 = arith.addf %142, %163 : vector<16x16xf32>
      %165 = vector.broadcast %41 : f32 to vector<22x16xf32>
      %166 = arith.mulf %69, %165 : vector<22x16xf32>
      %167 = vector.broadcast %42 : f32 to vector<22x16xf32>
      %168 = arith.mulf %70, %167 : vector<22x16xf32>
      %169 = arith.addf %166, %168 : vector<22x16xf32>
      %170 = vector.broadcast %43 : f32 to vector<22x16xf32>
      %171 = arith.mulf %71, %170 : vector<22x16xf32>
      %172 = arith.addf %169, %171 : vector<22x16xf32>
      %173 = vector.broadcast %44 : f32 to vector<22x16xf32>
      %174 = arith.mulf %72, %173 : vector<22x16xf32>
      %175 = arith.addf %172, %174 : vector<22x16xf32>
      %176 = vector.broadcast %45 : f32 to vector<22x16xf32>
      %177 = arith.mulf %73, %176 : vector<22x16xf32>
      %178 = arith.addf %175, %177 : vector<22x16xf32>
      %179 = vector.broadcast %46 : f32 to vector<22x16xf32>
      %180 = arith.mulf %74, %179 : vector<22x16xf32>
      %181 = arith.addf %178, %180 : vector<22x16xf32>
      %182 = vector.broadcast %47 : f32 to vector<22x16xf32>
      %183 = arith.mulf %75, %182 : vector<22x16xf32>
      %184 = arith.addf %181, %183 : vector<22x16xf32>
      %185 = vector.extract_strided_slice %184 {offsets = [4, 0], sizes = [16, 16], strides = [1, 1]} : vector<22x16xf32> to vector<16x16xf32>
      %186 = arith.addf %164, %185 : vector<16x16xf32>
      %187 = vector.broadcast %48 : f32 to vector<22x16xf32>
      %188 = arith.mulf %69, %187 : vector<22x16xf32>
      %189 = vector.broadcast %49 : f32 to vector<22x16xf32>
      %190 = arith.mulf %70, %189 : vector<22x16xf32>
      %191 = arith.addf %188, %190 : vector<22x16xf32>
      %192 = vector.broadcast %50 : f32 to vector<22x16xf32>
      %193 = arith.mulf %71, %192 : vector<22x16xf32>
      %194 = arith.addf %191, %193 : vector<22x16xf32>
      %195 = vector.broadcast %51 : f32 to vector<22x16xf32>
      %196 = arith.mulf %72, %195 : vector<22x16xf32>
      %197 = arith.addf %194, %196 : vector<22x16xf32>
      %198 = vector.broadcast %52 : f32 to vector<22x16xf32>
      %199 = arith.mulf %73, %198 : vector<22x16xf32>
      %200 = arith.addf %197, %199 : vector<22x16xf32>
      %201 = vector.broadcast %53 : f32 to vector<22x16xf32>
      %202 = arith.mulf %74, %201 : vector<22x16xf32>
      %203 = arith.addf %200, %202 : vector<22x16xf32>
      %204 = vector.broadcast %54 : f32 to vector<22x16xf32>
      %205 = arith.mulf %75, %204 : vector<22x16xf32>
      %206 = arith.addf %203, %205 : vector<22x16xf32>
      %207 = vector.extract_strided_slice %206 {offsets = [5, 0], sizes = [16, 16], strides = [1, 1]} : vector<22x16xf32> to vector<16x16xf32>
      %208 = arith.addf %186, %207 : vector<16x16xf32>
      %209 = vector.broadcast %55 : f32 to vector<22x16xf32>
      %210 = arith.mulf %69, %209 : vector<22x16xf32>
      %211 = vector.broadcast %56 : f32 to vector<22x16xf32>
      %212 = arith.mulf %70, %211 : vector<22x16xf32>
      %213 = arith.addf %210, %212 : vector<22x16xf32>
      %214 = vector.broadcast %57 : f32 to vector<22x16xf32>
      %215 = arith.mulf %71, %214 : vector<22x16xf32>
      %216 = arith.addf %213, %215 : vector<22x16xf32>
      %217 = vector.broadcast %58 : f32 to vector<22x16xf32>
      %218 = arith.mulf %72, %217 : vector<22x16xf32>
      %219 = arith.addf %216, %218 : vector<22x16xf32>
      %220 = vector.broadcast %59 : f32 to vector<22x16xf32>
      %221 = arith.mulf %73, %220 : vector<22x16xf32>
      %222 = arith.addf %219, %221 : vector<22x16xf32>
      %223 = vector.broadcast %60 : f32 to vector<22x16xf32>
      %224 = arith.mulf %74, %223 : vector<22x16xf32>
      %225 = arith.addf %222, %224 : vector<22x16xf32>
      %226 = vector.broadcast %61 : f32 to vector<22x16xf32>
      %227 = arith.mulf %75, %226 : vector<22x16xf32>
      %228 = arith.addf %225, %227 : vector<22x16xf32>
      %229 = vector.extract_strided_slice %228 {offsets = [6, 0], sizes = [16, 16], strides = [1, 1]} : vector<22x16xf32> to vector<16x16xf32>
      %230 = arith.addf %208, %229 : vector<16x16xf32>
      %231 = arith.negf %230 : vector<16x16xf32>
      %232 = math.exp %231 : vector<16x16xf32>
      %cst_37 = arith.constant 1.000000e+00 : f32
      %233 = vector.broadcast %cst_37 : f32 to vector<16x16xf32>
      %234 = arith.addf %233, %232 : vector<16x16xf32>
      %235 = arith.divf %233, %234 : vector<16x16xf32>
      %c0_38 = arith.constant 0 : index
      %c0_39 = arith.constant 0 : index
      %c0_40 = arith.constant 0 : index
      %c0_41 = arith.constant 0 : index
      %236 = vector.load %arg4[%c0_38, %c0_39, %c0_40, %c0_41] : memref<1x1x16x16xf32, #tpu.memory_space<vmem>>, vector<1x1x16x16xf32>
      %237 = vector.shape_cast %236 : vector<1x1x16x16xf32> to vector<16x16xf32>
      %238 = vector.shape_cast %235 : vector<16x16xf32> to vector<1x1x16x16xf32>
      tpu.vector_store %arg4[%c0_38, %c0_39, %c0_40, %c0_41], %238 {strides = array<i32>} : memref<1x1x16x16xf32, #tpu.memory_space<vmem>>, vector<1x1x16x16xf32>,
    } else {
    }
    return
  }
  func.func @transform_0(%arg0: i32, %arg1: i32) -> i32 {
    %c0_i32 = arith.constant 0 : i32
    %c0_i32_0 = arith.constant 0 : i32
    return %c0_i32 : i32
  }
  func.func @transform_1(%arg0: i32, %arg1: i32) -> (i32, i32, i32, i32) {
    %c0_i32 = arith.constant 0 : i32
    %c0_i32_0 = arith.constant 0 : i32
    %c0_i32_1 = arith.constant 0 : i32
    return %arg0, %arg1, %c0_i32, %c0_i32_0 : i32, i32, i32, i32
  }
  func.func @transform_2(%arg0: i32, %arg1: i32) -> (i32, i32, i32, i32) {
    %c0_i32 = arith.constant 0 : i32
    %c0_i32_0 = arith.constant 0 : i32
    %c0_i32_1 = arith.constant 0 : i32
    %c0_i32_2 = arith.constant 0 : i32
    return %arg0, %c0_i32, %c0_i32_0, %c0_i32_1 : i32, i32, i32, i32
  }
}

</mosaic_0001>

<llo_original>
// kernel: tpu_custom_call.1
$region0: #{tpu_custom_call.1}
  #allocation0 [shape = 'u32[]', space=smem, size = 0x4, offset = 0x4, fixed_abs, tag = 'smem constant byte address 0x4 - core index']
  #allocation1 [shape = 'u32[144,128]{1,0:T(1,128)}', space=vmem, size = 0x12000, scoped, tag = 'internal scratch']
  #allocation2 [shape = 'f32[16,16]{1,0:T(8,128)}', space=vmem, size = 0x2000, scoped, tag = 'scratch operand']
  #allocation3 [shape = 'f32[22,22]{1,0:T(8,128)}', space=vmem, size = 0x3000, scoped, tag = 'scratch operand']
  %s0 = inlined_call_operand.hbm [shape: f32[49], index: 0, kind: input, shape index: {}]
  %s1 = inlined_call_operand.hbm [shape: f32[2,4,16,16], index: 1, kind: input, shape index: {}]
  %s2 = inlined_call_operand.hbm [shape: f32[2,1,16,16], index: 2, kind: output, shape index: {}]
  %s3 = sld [smem:[#allocation0]]
  $region61: #{tpu_custom_call.1} parent=0
    _
  %s5 = ssub.s32 1, %s3
  %s6 = scalar_select 0, %s5, %s3
  $region1: #{tpu_custom_call.1} parent=0
    #allocation4 [shape = 'u8[512]{0}', space=smem, size = 0x200, scoped, tag = 'input window, operand 0, single buffered']
    #allocation5 [shape = 's32[2]{0}', space=sflag, size = 0x8, scoped, tag = 'scoped memory for tpu_custom_call.1']
    #allocation6 [shape = 's32[2]{0}', space=sflag, size = 0x8, scoped, tag = 'scoped memory for tpu_custom_call.1']
    #allocation7 [shape = 's32[2]{0}', space=sflag, size = 0x8, scoped, tag = 'scoped memory for tpu_custom_call.1']
    #allocation8 [shape = 'u8[32768]{0}', space=vmem, size = 0x8000, scoped, tag = 'input window, operand 1']
    #allocation9 [shape = 'u8[16384]{0}', space=vmem, size = 0x4000, scoped, tag = 'output window, operand 0']
    %7 = vsyncpa [#allocation7], 0
    %8 = vsyncpa [#allocation5], 0
    %s9 = scalar_lea.sflag [#allocation5], 1
    %10 = vsyncpa %s9, 0
    %11 = vsyncpa [#allocation6], 0
    %s12 = scalar_lea.sflag [#allocation6], 1
    %13 = vsyncpa %s12, 0
    loop: start=0, step=1, limit=6
    $region2: #{tpu_custom_call.1} parent=1 // loop_pre_header
      _
    $region3: #{tpu_custom_call.1} parent=1 // loop_header
      %s15 = sphi 0, %s19
      %p16 = scmp.ge.s32.totalorder %s15, 6
      %s22 = sphi 0, %s34
      %s23 = sphi 0, %s30
      %s24 = sphi 0, %s22
      %s25 = sphi 0, %s23
      %s26 = sphi 0, %s24
      %s27 = sphi 0, %s25
      %s35 = sphi 0, %s35
      %s37 = sphi 0, %s35
      %s38 = sphi 0, %s37
      %s52 = sphi 0, %s38
      %s60 = sphi 0, %s62
      %s63 = sphi 0, %s60
      %s64 = sphi 0, %s63
      %s80 = sphi 0, %s64
      %s86 = sphi 0, %s88
      %s89 = sphi 0, %s86
      %s90 = sphi 0, %s89
      %s106 = sphi 0, %s90
    $region4: #{tpu_custom_call.1} parent=1 // loop_header_branch
      %18 = sbr.rel (%p16) target = $region8
    $region5: #{tpu_custom_call.1} parent=1 // loop_body
      %s20 = ssub.s32 %s15, 1
      %s21 = ssub.s32 %s15, 2
      %s28 = sadd.s32 1, %s23
      %p29 = scmp.ge.s32.totalorder %s28, 2
      %s30 = scalar_select %p29, 0, %s28
      %s31 = sadd.s32 1, %s22
      %s32 = scalar_select %p29, %s31, %s22
      %p33 = scmp.ge.s32.totalorder %s32, 2
      %s34 = scalar_select %p33, 0, %s32
      %s36 = sadd.s32 %s35, 1
      %p39 = scmp.eq.s32.totalorder %s15, 3
      %p40 = scmp.ne.s32.totalorder %s35, %s37
      %p41 = scmp.eq.s32.totalorder %s15, 0
      %p42 = por %p40, %p41
      %p43 = scmp.ne.s32.totalorder %s35, %s37
      %p44 = scmp.eq.s32.totalorder %s20, 3
      %p45 = por %p43, %p44
      %p46 = scmp.ne.s32.totalorder %s37, %s38
      %p47 = scmp.eq.s32.totalorder %s20, 0
      %p48 = por %p46, %p47
      %p49 = scmp.ne.s32.totalorder %s37, %s38
      %p50 = scmp.eq.s32.totalorder %s21, 3
      %p51 = por %p49, %p50
      %p53 = scmp.ne.s32.totalorder %s38, %s52
      %p54 = scmp.eq.s32.totalorder %s21, 0
      %p55 = por %p53, %p54
      %s56 = ssub.s32 %s22, %s34
      %s57 = ssub.s32 %s23, %s30
      %s58 = sor.u32 %s56, %s57
      %p59 = scmp.eq.s32.totalorder %s58, 0
      %s61 = sadd.s32 %s60, 1
      %s62 = scalar_select %p59, %s60, %s61
      %p65 = pneg %p59
      %p66 = scmp.eq.s32.totalorder %s15, 3
      %p67 = por %p65, %p66
      %p68 = scmp.ne.s32.totalorder %s60, %s63
      %p69 = scmp.eq.s32.totalorder %s15, 0
      %p70 = por %p68, %p69
      %p71 = scmp.ne.s32.totalorder %s60, %s63
      %p72 = scmp.eq.s32.totalorder %s20, 3
      %p73 = por %p71, %p72
      %p74 = scmp.ne.s32.totalorder %s63, %s64
      %p75 = scmp.eq.s32.totalorder %s20, 0
      %p76 = por %p74, %p75
      %p77 = scmp.ne.s32.totalorder %s63, %s64
      %p78 = scmp.eq.s32.totalorder %s21, 3
      %p79 = por %p77, %p78
      %p81 = scmp.ne.s32.totalorder %s64, %s80
      %p82 = scmp.eq.s32.totalorder %s21, 0
      %p83 = por %p81, %p82
      %s84 = ssub.s32 %s22, %s34
      %p85 = scmp.eq.s32.totalorder %s84, 0
      %s87 = sadd.s32 %s86, 1
      %s88 = scalar_select %p85, %s86, %s87
      %p91 = pneg %p85
      %p92 = scmp.eq.s32.totalorder %s15, 3
      %p93 = por %p91, %p92
      %p94 = scmp.ne.s32.totalorder %s86, %s89
      %p95 = scmp.eq.s32.totalorder %s15, 0
      %p96 = por %p94, %p95
      %p97 = scmp.ne.s32.totalorder %s86, %s89
      %p98 = scmp.eq.s32.totalorder %s20, 3
      %p99 = por %p97, %p98
      %p100 = scmp.ne.s32.totalorder %s89, %s90
      %p101 = scmp.eq.s32.totalorder %s20, 0
      %p102 = por %p100, %p101
      %p103 = scmp.ne.s32.totalorder %s89, %s90
      %p104 = scmp.eq.s32.totalorder %s21, 3
      %p105 = por %p103, %p104
      %p107 = scmp.ne.s32.totalorder %s90, %s106
      %p108 = scmp.eq.s32.totalorder %s21, 0
      %p109 = por %p107, %p108
      %p110 = scmp.le.s32.totalorder 1, %s15
      %p111 = scmp.lt.s32.totalorder %s15, 5
      %p112 = pnand %p110, %p111
      %p113 = pneg %p112
      // Predicated region
      $region9: #{tpu_custom_call.1} parent=5 // pred_check
        _
      $region10: #{tpu_custom_call.1} parent=5 // pred_check_branch
        %115 = sbr.rel (%p112) target = $region12
      $region11: #{tpu_custom_call.1} parent=5 // pred_region
        %s116 = ssub.s32 %s15, 1
        // Predicated region
        $region13: #{tpu_custom_call.1} parent=11 // pred_check
          %p117 = pneg %p48
        $region14: #{tpu_custom_call.1} parent=11 // pred_check_branch
          %119 = sbr.rel (%p117) target = $region16
        $region15: #{tpu_custom_call.1} parent=11 // pred_region
          %s121 = ssub.s32 16, 16
          %122 = vsyncadd [#allocation7], %s121
          %125 = dma.hbm_to_smem %s0, 16, [#allocation4], [#allocation7]
        $region16: #{tpu_custom_call.1} parent=11 // pred_fallthru
          _
      $region12: #{tpu_custom_call.1} parent=5 // pred_fallthru
        _
      %p126 = scmp.lt.s32.totalorder %s15, 4
      // Predicated region
      $region17: #{tpu_custom_call.1} parent=5 // pred_check
        %p127 = pneg %p126
      $region18: #{tpu_custom_call.1} parent=5 // pred_check_branch
        %129 = sbr.rel (%p127) target = $region20
      $region19: #{tpu_custom_call.1} parent=5 // pred_region
        // Predicated region
        $region21: #{tpu_custom_call.1} parent=19 // pred_check
          %p130 = pneg %p70
        $region22: #{tpu_custom_call.1} parent=19 // pred_check_branch
          %132 = sbr.rel (%p130) target = $region24
        $region23: #{tpu_custom_call.1} parent=19 // pred_region
          %s133 = sand.u32 %s60, 1
          %s134 = scalar_lea.sflag [#allocation5], %s133
          %s135 = sand.u32 %s60, 1
          %s136 = smul.addr %s135, 32
          %s137 = scalar_lea.vmem [#allocation8], %s136
          %s138 = smul.u32 2, %s23
          %s140 = ssub.s32 512, 512
          %141 = vsyncadd %s134, %s140
          %s142 = smul.addr %s138, 2
          %s143 = smul.addr %s22, 8
          %s144 = sadd.s32 %s142, %s143
          %s145 = smul.addr %s144, 128
          %s146 = scalar_lea.hbm %s1, %s145
          %s147 = sshll.u32 %s137, 4
          %s148 = int_to_ptr.vmem [resolvable:$true] %s147
          %153 = dma.hbm_to_vmem [thread:$0]  %s146, 512, %s148, %s134, 128, 128, 8
        $region24: #{tpu_custom_call.1} parent=19 // pred_fallthru
          _
      $region20: #{tpu_custom_call.1} parent=5 // pred_fallthru
        _
      %p154 = scmp.le.s32.totalorder 1, %s15
      %p155 = scmp.lt.s32.totalorder %s15, 5
      %p156 = pnand %p154, %p155
      %p157 = pneg %p156
      // Predicated region
      $region25: #{tpu_custom_call.1} parent=5 // pred_check
        _
      $region26: #{tpu_custom_call.1} parent=5 // pred_check_branch
        %159 = sbr.rel (%p156) target = $region28
      $region27: #{tpu_custom_call.1} parent=5 // pred_region
        %s160 = ssub.s32 %s15, 1
        // Predicated region
        $region29: #{tpu_custom_call.1} parent=27 // pred_check
          %p161 = pneg %p48
        $region30: #{tpu_custom_call.1} parent=27 // pred_check_branch
          %163 = sbr.rel (%p161) target = $region32
        $region31: #{tpu_custom_call.1} parent=27 // pred_region
          %164 = dma.done [#allocation7], 16
        $region32: #{tpu_custom_call.1} parent=27 // pred_fallthru
          _
        %s165 = sand.u32 %s63, 1
        %s166 = scalar_lea.sflag [#allocation5], %s165
        %s167 = sand.u32 %s63, 1
        %s168 = smul.addr %s167, 32
        %s169 = scalar_lea.vmem [#allocation8], %s168
        // Predicated region
        $region33: #{tpu_custom_call.1} parent=27 // pred_check
          %p170 = pneg %p76
        $region34: #{tpu_custom_call.1} parent=27 // pred_check_branch
          %172 = sbr.rel (%p170) target = $region36
        $region35: #{tpu_custom_call.1} parent=27 // pred_region
          %173 = dma.done %s166, 512
        $region36: #{tpu_custom_call.1} parent=27 // pred_fallthru
          _
        %174 = sfence
        %p175 = pneg %p48
        %p176 = pneg %p45
        %s177 = sand.u32 %s63, 1
        %s178 = scalar_lea.sflag [#allocation5], %s177
        %s179 = sand.u32 %s63, 1
        %s180 = smul.addr %s179, 32
        %s181 = scalar_lea.vmem [#allocation8], %s180
        %p182 = pneg %p76
        %p183 = pneg %p73
        %p184 = pneg %p102
        %p185 = pneg %p99
        %s186 = sand.u32 %s89, 1
        %s187 = scalar_lea.sflag [#allocation6], %s186
        %s188 = sand.u32 %s89, 1
        %s189 = smul.addr %s188, 16
        %s190 = scalar_lea.vmem [#allocation9], %s189
        %s191 = smul.u32 2, %s25
        %v192 = vld [vmem:[%s169] sm:$0xff]
        %v193 = vld [vmem:[%s169 + $0x8] sm:$0xff]
        %v194 = vld [vmem:[%s169 + $0x10] sm:$0xff]
        %v195 = vld [vmem:[%s169 + $0x18] sm:$0xff]
        %vm196 = vcmask 130048
        %v197 = vsel %vm196, %v192, -inf
        %v198 = vsel %vm196, %v194, -inf
        %v199 = vmax.f32 %v197, %v198
        %v200 = vsel %vm196, %v193, -inf
        %v201 = vsel %vm196, %v195, -inf
        %v202 = vmax.f32 %v200, %v201
        %p203 = scmp.eq.s32.totalorder %s25, 0
        // Predicated region
        $region37: #{tpu_custom_call.1} parent=27 // pred_check
          %p204 = pneg %p203
        $region38: #{tpu_custom_call.1} parent=27 // pred_check_branch
          %206 = sbr.rel (%p204) target = $region40
        $region39: #{tpu_custom_call.1} parent=27 // pred_region
          %207 = vst.msk [vmem:[#allocation2] sm:$0xff] %vm196, %v199
          %208 = vst.msk [vmem:[#allocation2 + $0x8] sm:$0xff] %vm196, %v202
        $region40: #{tpu_custom_call.1} parent=27 // pred_fallthru
          _
        %p209 = scmp.ne.s32.totalorder %s25, 0
        // Predicated region
        $region41: #{tpu_custom_call.1} parent=27 // pred_check
          %p210 = pneg %p209
        $region42: #{tpu_custom_call.1} parent=27 // pred_check_branch
          %212 = sbr.rel (%p210) target = $region44
        $region43: #{tpu_custom_call.1} parent=27 // pred_region
          %v213 = vld [vmem:[#allocation2] sm:$0xff]
          %v214 = vld [vmem:[#allocation2 + $0x8] sm:$0xff]
          %v215 = vmax.f32 %v213, %v199
          %v216 = vmax.f32 %v214, %v202
          %217 = vst.msk [vmem:[#allocation2] sm:$0xff] %vm196, %v215
          %218 = vst.msk [vmem:[#allocation2 + $0x8] sm:$0xff] %vm196, %v216
        $region44: #{tpu_custom_call.1} parent=27 // pred_fallthru
          _
        %p219 = scmp.eq.s32.totalorder %s25, 1
        // Predicated region
        $region45: #{tpu_custom_call.1} parent=27 // pred_check
          %p220 = pneg %p219
        $region46: #{tpu_custom_call.1} parent=27 // pred_check_branch
          %222 = sbr.rel (%p220) target = $region48
        $region47: #{tpu_custom_call.1} parent=27 // pred_region
          %v223 = vld [vmem:[#allocation2] sm:$0xff]
          %v224 = vld [vmem:[#allocation2 + $0x8] sm:$0xff]
          %s225 = sld [smem:[#allocation4]]
          %s226 = sld [smem:[#allocation4 + $0x1]]
          %s227 = sld [smem:[#allocation4 + $0x2]]
          %s228 = sld [smem:[#allocation4 + $0x3]]
          %s229 = sld [smem:[#allocation4 + $0x4]]
          %s230 = sld [smem:[#allocation4 + $0x5]]
          %s231 = sld [smem:[#allocation4 + $0x6]]
          %s232 = sld [smem:[#allocation4 + $0x7]]
          %s233 = sld [smem:[#allocation4 + $0x8]]
          %s234 = sld [smem:[#allocation4 + $0x9]]
          %s235 = sld [smem:[#allocation4 + $0xa]]
          %s236 = sld [smem:[#allocation4 + $0xb]]
          %s237 = sld [smem:[#allocation4 + $0xc]]
          %s238 = sld [smem:[#allocation4 + $0xd]]
          %s239 = sld [smem:[#allocation4 + $0xe]]
          %s240 = sld [smem:[#allocation4 + $0xf]]
          %s241 = sld [smem:[#allocation4 + $0x10]]
          %s242 = sld [smem:[#allocation4 + $0x11]]
          %s243 = sld [smem:[#allocation4 + $0x12]]
          %s244 = sld [smem:[#allocation4 + $0x13]]
          %s245 = sld [smem:[#allocation4 + $0x14]]
          %s246 = sld [smem:[#allocation4 + $0x15]]
          %s247 = sld [smem:[#allocation4 + $0x16]]
          %s248 = sld [smem:[#allocation4 + $0x17]]
          %s249 = sld [smem:[#allocation4 + $0x18]]
          %s250 = sld [smem:[#allocation4 + $0x19]]
          %s251 = sld [smem:[#allocation4 + $0x1a]]
          %s252 = sld [smem:[#allocation4 + $0x1b]]
          %s253 = sld [smem:[#allocation4 + $0x1c]]
          %s254 = sld [smem:[#allocation4 + $0x1d]]
          %s255 = sld [smem:[#allocation4 + $0x1e]]
          %s256 = sld [smem:[#allocation4 + $0x1f]]
          %s257 = sld [smem:[#allocation4 + $0x20]]
          %s258 = sld [smem:[#allocation4 + $0x21]]
          %s259 = sld [smem:[#allocation4 + $0x22]]
          %s260 = sld [smem:[#allocation4 + $0x23]]
          %s261 = sld [smem:[#allocation4 + $0x24]]
          %s262 = sld [smem:[#allocation4 + $0x25]]
          %s263 = sld [smem:[#allocation4 + $0x26]]
          %s264 = sld [smem:[#allocation4 + $0x27]]
          %s265 = sld [smem:[#allocation4 + $0x28]]
          %s266 = sld [smem:[#allocation4 + $0x29]]
          %s267 = sld [smem:[#allocation4 + $0x2a]]
          %s268 = sld [smem:[#allocation4 + $0x2b]]
          %s269 = sld [smem:[#allocation4 + $0x2c]]
          %s270 = sld [smem:[#allocation4 + $0x2d]]
          %s271 = sld [smem:[#allocation4 + $0x2e]]
          %s272 = sld [smem:[#allocation4 + $0x2f]]
          %s273 = sld [smem:[#allocation4 + $0x30]]
          %vm274 = vcmask 174080
          %275 = vst.msk [vmem:[#allocation3] sm:$0x7] %vm274, 0.0
          %276 = vst.msk [vmem:[#allocation3 + $0x13] sm:$0x7] %vm274, 0.0
          %vm277 = vcmask 23552
          %278 = vst.msk [vmem:[#allocation3 + $0x3] sm:$0xff] %vm277, 0.0
          %279 = vst.msk [vmem:[#allocation3 + $0xb] sm:$0xff] %vm277, 0.0
          %vm280 = vcmask 179352
          %281 = vst.msk [vmem:[#allocation3 + $0x3] sm:$0xff] %vm280, 0.0
          %282 = vst.msk [vmem:[#allocation3 + $0xb] sm:$0xff] %vm280, 0.0
          %285 = vrot.lane.b32.xlu0 %v223, 3
          %v286 = vpop.permute.xlu0 %285
          %287 = vrot.lane.b32.xlu0 %v224, 3
          %v288 = vpop.permute.xlu0 %287
          %vm291 = vcmask 154648
          %292 = vst.msk [vmem:[#allocation3 + $0x3] sm:$0xff] %vm291, %v286
          %293 = vst.msk [vmem:[#allocation3 + $0xb] sm:$0xff] %vm291, %v288
          %v294 = vld [vmem:[#allocation3] sm:$0xff]
          %v295 = vld [vmem:[#allocation3 + $0x8] sm:$0xff]
          %v296 = vld [vmem:[#allocation3 + $0x10] sm:$0x3f]
          %v297 = vstv %s225
          %v298 = vmul.f32 %v294, %v297
          %v299 = vmul.f32 %v295, %v297
          %v300 = vstv %s226
          %v301 = vmul.f32 %v294, %v300
          %v302 = vmul.f32 %v295, %v300
          %305 = vrot.lane.b32.xlu0 %v301, 127
          %v306 = vpop.permute.xlu0 %305
          %307 = vrot.lane.b32.xlu0 %v302, 127
          %v308 = vpop.permute.xlu0 %307
          %v311 = vadd.f32 %v298, %v306
          %v312 = vadd.f32 %v299, %v308
          %v313 = vstv %s227
          %v314 = vmul.f32 %v294, %v313
          %v315 = vmul.f32 %v295, %v313
          %318 = vrot.lane.b32.xlu0 %v314, 126
          %v319 = vpop.permute.xlu0 %318
          %320 = vrot.lane.b32.xlu0 %v315, 126
          %v321 = vpop.permute.xlu0 %320
          %v324 = vadd.f32 %v311, %v319
          %v325 = vadd.f32 %v312, %v321
          %v326 = vstv %s228
          %v327 = vmul.f32 %v294, %v326
          %v328 = vmul.f32 %v295, %v326
          %331 = vrot.lane.b32.xlu0 %v327, 125
          %v332 = vpop.permute.xlu0 %331
          %333 = vrot.lane.b32.xlu0 %v328, 125
          %v334 = vpop.permute.xlu0 %333
          %v337 = vadd.f32 %v324, %v332
          %v338 = vadd.f32 %v325, %v334
          %v339 = vstv %s229
          %v340 = vmul.f32 %v294, %v339
          %v341 = vmul.f32 %v295, %v339
          %344 = vrot.lane.b32.xlu0 %v340, 124
          %v345 = vpop.permute.xlu0 %344
          %346 = vrot.lane.b32.xlu0 %v341, 124
          %v347 = vpop.permute.xlu0 %346
          %v350 = vadd.f32 %v337, %v345
          %v351 = vadd.f32 %v338, %v347
          %v352 = vstv %s230
          %v353 = vmul.f32 %v294, %v352
          %v354 = vmul.f32 %v295, %v352
          %357 = vrot.lane.b32.xlu0 %v353, 123
          %v358 = vpop.permute.xlu0 %357
          %359 = vrot.lane.b32.xlu0 %v354, 123
          %v360 = vpop.permute.xlu0 %359
          %v363 = vadd.f32 %v350, %v358
          %v364 = vadd.f32 %v351, %v360
          %v365 = vstv %s231
          %v366 = vmul.f32 %v294, %v365
          %v367 = vmul.f32 %v295, %v365
          %370 = vrot.lane.b32.xlu0 %v366, 122
          %v371 = vpop.permute.xlu0 %370
          %372 = vrot.lane.b32.xlu0 %v367, 122
          %v373 = vpop.permute.xlu0 %372
          %v376 = vadd.f32 %v363, %v371
          %v377 = vadd.f32 %v364, %v373
          %v378 = vadd.f32 %v376, 0.0
          %v379 = vadd.f32 %v377, 0.0
          %v380 = vstv %s232
          %v381 = vmul.f32 %v294, %v380
          %v382 = vmul.f32 %v295, %v380
          %v383 = vmul.f32 %v296, %v380
          %v384 = vstv %s233
          %v385 = vmul.f32 %v294, %v384
          %v386 = vmul.f32 %v295, %v384
          %v387 = vmul.f32 %v296, %v384
          %391 = vrot.lane.b32.xlu0 %v385, 127
          %v392 = vpop.permute.xlu0 %391
          %393 = vrot.lane.b32.xlu0 %v386, 127
          %v394 = vpop.permute.xlu0 %393
          %395 = vrot.lane.b32.xlu0 %v387, 127
          %v396 = vpop.permute.xlu0 %395
          %v400 = vadd.f32 %v381, %v392
          %v401 = vadd.f32 %v382, %v394
          %v402 = vadd.f32 %v383, %v396
          %v403 = vstv %s234
          %v404 = vmul.f32 %v294, %v403
          %v405 = vmul.f32 %v295, %v403
          %v406 = vmul.f32 %v296, %v403
          %410 = vrot.lane.b32.xlu0 %v404, 126
          %v411 = vpop.permute.xlu0 %410
          %412 = vrot.lane.b32.xlu0 %v405, 126
          %v413 = vpop.permute.xlu0 %412
          %414 = vrot.lane.b32.xlu0 %v406, 126
          %v415 = vpop.permute.xlu0 %414
          %v419 = vadd.f32 %v400, %v411
          %v420 = vadd.f32 %v401, %v413
          %v421 = vadd.f32 %v402, %v415
          %v422 = vstv %s235
          %v423 = vmul.f32 %v294, %v422
          %v424 = vmul.f32 %v295, %v422
          %v425 = vmul.f32 %v296, %v422
          %429 = vrot.lane.b32.xlu0 %v423, 125
          %v430 = vpop.permute.xlu0 %429
          %431 = vrot.lane.b32.xlu0 %v424, 125
          %v432 = vpop.permute.xlu0 %431
          %433 = vrot.lane.b32.xlu0 %v425, 125
          %v434 = vpop.permute.xlu0 %433
          %v438 = vadd.f32 %v419, %v430
          %v439 = vadd.f32 %v420, %v432
          %v440 = vadd.f32 %v421, %v434
          %v441 = vstv %s236
          %v442 = vmul.f32 %v294, %v441
          %v443 = vmul.f32 %v295, %v441
          %v444 = vmul.f32 %v296, %v441
          %448 = vrot.lane.b32.xlu0 %v442, 124
          %v449 = vpop.permute.xlu0 %448
          %450 = vrot.lane.b32.xlu0 %v443, 124
          %v451 = vpop.permute.xlu0 %450
          %452 = vrot.lane.b32.xlu0 %v444, 124
          %v453 = vpop.permute.xlu0 %452
          %v457 = vadd.f32 %v438, %v449
          %v458 = vadd.f32 %v439, %v451
          %v459 = vadd.f32 %v440, %v453
          %v460 = vstv %s237
          %v461 = vmul.f32 %v294, %v460
          %v462 = vmul.f32 %v295, %v460
          %v463 = vmul.f32 %v296, %v460
          %467 = vrot.lane.b32.xlu0 %v461, 123
          %v468 = vpop.permute.xlu0 %467
          %469 = vrot.lane.b32.xlu0 %v462, 123
          %v470 = vpop.permute.xlu0 %469
          %471 = vrot.lane.b32.xlu0 %v463, 123
          %v472 = vpop.permute.xlu0 %471
          %v476 = vadd.f32 %v457, %v468
          %v477 = vadd.f32 %v458, %v470
          %v478 = vadd.f32 %v459, %v472
          %v479 = vstv %s238
          %v480 = vmul.f32 %v294, %v479
          %v481 = vmul.f32 %v295, %v479
          %v482 = vmul.f32 %v296, %v479
          %486 = vrot.lane.b32.xlu0 %v480, 122
          %v487 = vpop.permute.xlu0 %486
          %488 = vrot.lane.b32.xlu0 %v481, 122
          %v489 = vpop.permute.xlu0 %488
          %490 = vrot.lane.b32.xlu0 %v482, 122
          %v491 = vpop.permute.xlu0 %490
          %v495 = vadd.f32 %v476, %v487
          %v496 = vadd.f32 %v477, %v489
          %v497 = vadd.f32 %v478, %v491
          %vm501 = vcmask 1046528
          %v502 = vrot.slane %v495, 1
          %v503 = vrot.slane %v496, 1
          %v504 = vsel %vm501, %v502, %v503
          %v505 = vrot.slane %v497, 1
          %v506 = vsel %vm501, %v503, %v505
          %v509 = vadd.f32 %v378, %v504
          %v510 = vadd.f32 %v379, %v506
          %v511 = vstv %s239
          %v512 = vmul.f32 %v294, %v511
          %v513 = vmul.f32 %v295, %v511
          %v514 = vmul.f32 %v296, %v511
          %v515 = vstv %s240
          %v516 = vmul.f32 %v294, %v515
          %v517 = vmul.f32 %v295, %v515
          %v518 = vmul.f32 %v296, %v515
          %522 = vrot.lane.b32.xlu0 %v516, 127
          %v523 = vpop.permute.xlu0 %522
          %524 = vrot.lane.b32.xlu0 %v517, 127
          %v525 = vpop.permute.xlu0 %524
          %526 = vrot.lane.b32.xlu0 %v518, 127
          %v527 = vpop.permute.xlu0 %526
          %v531 = vadd.f32 %v512, %v523
          %v532 = vadd.f32 %v513, %v525
          %v533 = vadd.f32 %v514, %v527
          %v534 = vstv %s241
          %v535 = vmul.f32 %v294, %v534
          %v536 = vmul.f32 %v295, %v534
          %v537 = vmul.f32 %v296, %v534
          %541 = vrot.lane.b32.xlu0 %v535, 126
          %v542 = vpop.permute.xlu0 %541
          %543 = vrot.lane.b32.xlu0 %v536, 126
          %v544 = vpop.permute.xlu0 %543
          %545 = vrot.lane.b32.xlu0 %v537, 126
          %v546 = vpop.permute.xlu0 %545
          %v550 = vadd.f32 %v531, %v542
          %v551 = vadd.f32 %v532, %v544
          %v552 = vadd.f32 %v533, %v546
          %v553 = vstv %s242
          %v554 = vmul.f32 %v294, %v553
          %v555 = vmul.f32 %v295, %v553
          %v556 = vmul.f32 %v296, %v553
          %560 = vrot.lane.b32.xlu0 %v554, 125
          %v561 = vpop.permute.xlu0 %560
          %562 = vrot.lane.b32.xlu0 %v555, 125
          %v563 = vpop.permute.xlu0 %562
          %564 = vrot.lane.b32.xlu0 %v556, 125
          %v565 = vpop.permute.xlu0 %564
          %v569 = vadd.f32 %v550, %v561
          %v570 = vadd.f32 %v551, %v563
          %v571 = vadd.f32 %v552, %v565
          %v572 = vstv %s243
          %v573 = vmul.f32 %v294, %v572
          %v574 = vmul.f32 %v295, %v572
          %v575 = vmul.f32 %v296, %v572
          %579 = vrot.lane.b32.xlu0 %v573, 124
          %v580 = vpop.permute.xlu0 %579
          %581 = vrot.lane.b32.xlu0 %v574, 124
          %v582 = vpop.permute.xlu0 %581
          %583 = vrot.lane.b32.xlu0 %v575, 124
          %v584 = vpop.permute.xlu0 %583
          %v588 = vadd.f32 %v569, %v580
          %v589 = vadd.f32 %v570, %v582
          %v590 = vadd.f32 %v571, %v584
          %v591 = vstv %s244
          %v592 = vmul.f32 %v294, %v591
          %v593 = vmul.f32 %v295, %v591
          %v594 = vmul.f32 %v296, %v591
          %598 = vrot.lane.b32.xlu0 %v592, 123
          %v599 = vpop.permute.xlu0 %598
          %600 = vrot.lane.b32.xlu0 %v593, 123
          %v601 = vpop.permute.xlu0 %600
          %602 = vrot.lane.b32.xlu0 %v594, 123
          %v603 = vpop.permute.xlu0 %602
          %v607 = vadd.f32 %v588, %v599
          %v608 = vadd.f32 %v589, %v601
          %v609 = vadd.f32 %v590, %v603
          %v610 = vstv %s245
          %v611 = vmul.f32 %v294, %v610
          %v612 = vmul.f32 %v295, %v610
          %v613 = vmul.f32 %v296, %v610
          %617 = vrot.lane.b32.xlu0 %v611, 122
          %v618 = vpop.permute.xlu0 %617
          %619 = vrot.lane.b32.xlu0 %v612, 122
          %v620 = vpop.permute.xlu0 %619
          %621 = vrot.lane.b32.xlu0 %v613, 122
          %v622 = vpop.permute.xlu0 %621
          %v626 = vadd.f32 %v607, %v618
          %v627 = vadd.f32 %v608, %v620
          %v628 = vadd.f32 %v609, %v622
          %vm632 = vcmask 1045504
          %v633 = vrot.slane %v626, 2
          %v634 = vrot.slane %v627, 2
          %v635 = vsel %vm632, %v633, %v634
          %v636 = vrot.slane %v628, 2
          %v637 = vsel %vm632, %v634, %v636
          %v640 = vadd.f32 %v509, %v635
          %v641 = vadd.f32 %v510, %v637
          %v642 = vstv %s246
          %v643 = vmul.f32 %v294, %v642
          %v644 = vmul.f32 %v295, %v642
          %v645 = vmul.f32 %v296, %v642
          %v646 = vstv %s247
          %v647 = vmul.f32 %v294, %v646
          %v648 = vmul.f32 %v295, %v646
          %v649 = vmul.f32 %v296, %v646
          %653 = vrot.lane.b32.xlu0 %v647, 127
          %v654 = vpop.permute.xlu0 %653
          %655 = vrot.lane.b32.xlu0 %v648, 127
          %v656 = vpop.permute.xlu0 %655
          %657 = vrot.lane.b32.xlu0 %v649, 127
          %v658 = vpop.permute.xlu0 %657
          %v662 = vadd.f32 %v643, %v654
          %v663 = vadd.f32 %v644, %v656
          %v664 = vadd.f32 %v645, %v658
          %v665 = vstv %s248
          %v666 = vmul.f32 %v294, %v665
          %v667 = vmul.f32 %v295, %v665
          %v668 = vmul.f32 %v296, %v665
          %672 = vrot.lane.b32.xlu0 %v666, 126
          %v673 = vpop.permute.xlu0 %672
          %674 = vrot.lane.b32.xlu0 %v667, 126
          %v675 = vpop.permute.xlu0 %674
          %676 = vrot.lane.b32.xlu0 %v668, 126
          %v677 = vpop.permute.xlu0 %676
          %v681 = vadd.f32 %v662, %v673
          %v682 = vadd.f32 %v663, %v675
          %v683 = vadd.f32 %v664, %v677
          %v684 = vstv %s249
          %v685 = vmul.f32 %v294, %v684
          %v686 = vmul.f32 %v295, %v684
          %v687 = vmul.f32 %v296, %v684
          %691 = vrot.lane.b32.xlu0 %v685, 125
          %v692 = vpop.permute.xlu0 %691
          %693 = vrot.lane.b32.xlu0 %v686, 125
          %v694 = vpop.permute.xlu0 %693
          %695 = vrot.lane.b32.xlu0 %v687, 125
          %v696 = vpop.permute.xlu0 %695
          %v700 = vadd.f32 %v681, %v692
          %v701 = vadd.f32 %v682, %v694
          %v702 = vadd.f32 %v683, %v696
          %v703 = vstv %s250
          %v704 = vmul.f32 %v294, %v703
          %v705 = vmul.f32 %v295, %v703
          %v706 = vmul.f32 %v296, %v703
          %710 = vrot.lane.b32.xlu0 %v704, 124
          %v711 = vpop.permute.xlu0 %710
          %712 = vrot.lane.b32.xlu0 %v705, 124
          %v713 = vpop.permute.xlu0 %712
          %714 = vrot.lane.b32.xlu0 %v706, 124
          %v715 = vpop.permute.xlu0 %714
          %v719 = vadd.f32 %v700, %v711
          %v720 = vadd.f32 %v701, %v713
          %v721 = vadd.f32 %v702, %v715
          %v722 = vstv %s251
          %v723 = vmul.f32 %v294, %v722
          %v724 = vmul.f32 %v295, %v722
          %v725 = vmul.f32 %v296, %v722
          %729 = vrot.lane.b32.xlu0 %v723, 123
          %v730 = vpop.permute.xlu0 %729
          %731 = vrot.lane.b32.xlu0 %v724, 123
          %v732 = vpop.permute.xlu0 %731
          %733 = vrot.lane.b32.xlu0 %v725, 123
          %v734 = vpop.permute.xlu0 %733
          %v738 = vadd.f32 %v719, %v730
          %v739 = vadd.f32 %v720, %v732
          %v740 = vadd.f32 %v721, %v734
          %v741 = vstv %s252
          %v742 = vmul.f32 %v294, %v741
          %v743 = vmul.f32 %v295, %v741
          %v744 = vmul.f32 %v296, %v741
          %748 = vrot.lane.b32.xlu0 %v742, 122
          %v749 = vpop.permute.xlu0 %748
          %750 = vrot.lane.b32.xlu0 %v743, 122
          %v751 = vpop.permute.xlu0 %750
          %752 = vrot.lane.b32.xlu0 %v744, 122
          %v753 = vpop.permute.xlu0 %752
          %v757 = vadd.f32 %v738, %v749
          %v758 = vadd.f32 %v739, %v751
          %v759 = vadd.f32 %v740, %v753
          %vm763 = vcmask 1044480
          %v764 = vrot.slane %v757, 3
          %v765 = vrot.slane %v758, 3
          %v766 = vsel %vm763, %v764, %v765
          %v767 = vrot.slane %v759, 3
          %v768 = vsel %vm763, %v765, %v767
          %v771 = vadd.f32 %v640, %v766
          %v772 = vadd.f32 %v641, %v768
          %v773 = vstv %s253
          %v774 = vmul.f32 %v294, %v773
          %v775 = vmul.f32 %v295, %v773
          %v776 = vmul.f32 %v296, %v773
          %v777 = vstv %s254
          %v778 = vmul.f32 %v294, %v777
          %v779 = vmul.f32 %v295, %v777
          %v780 = vmul.f32 %v296, %v777
          %784 = vrot.lane.b32.xlu0 %v778, 127
          %v785 = vpop.permute.xlu0 %784
          %786 = vrot.lane.b32.xlu0 %v779, 127
          %v787 = vpop.permute.xlu0 %786
          %788 = vrot.lane.b32.xlu0 %v780, 127
          %v789 = vpop.permute.xlu0 %788
          %v793 = vadd.f32 %v774, %v785
          %v794 = vadd.f32 %v775, %v787
          %v795 = vadd.f32 %v776, %v789
          %v796 = vstv %s255
          %v797 = vmul.f32 %v294, %v796
          %v798 = vmul.f32 %v295, %v796
          %v799 = vmul.f32 %v296, %v796
          %803 = vrot.lane.b32.xlu0 %v797, 126
          %v804 = vpop.permute.xlu0 %803
          %805 = vrot.lane.b32.xlu0 %v798, 126
          %v806 = vpop.permute.xlu0 %805
          %807 = vrot.lane.b32.xlu0 %v799, 126
          %v808 = vpop.permute.xlu0 %807
          %v812 = vadd.f32 %v793, %v804
          %v813 = vadd.f32 %v794, %v806
          %v814 = vadd.f32 %v795, %v808
          %v815 = vstv %s256
          %v816 = vmul.f32 %v294, %v815
          %v817 = vmul.f32 %v295, %v815
          %v818 = vmul.f32 %v296, %v815
          %822 = vrot.lane.b32.xlu0 %v816, 125
          %v823 = vpop.permute.xlu0 %822
          %824 = vrot.lane.b32.xlu0 %v817, 125
          %v825 = vpop.permute.xlu0 %824
          %826 = vrot.lane.b32.xlu0 %v818, 125
          %v827 = vpop.permute.xlu0 %826
          %v831 = vadd.f32 %v812, %v823
          %v832 = vadd.f32 %v813, %v825
          %v833 = vadd.f32 %v814, %v827
          %v834 = vstv %s257
          %v835 = vmul.f32 %v294, %v834
          %v836 = vmul.f32 %v295, %v834
          %v837 = vmul.f32 %v296, %v834
          %841 = vrot.lane.b32.xlu0 %v835, 124
          %v842 = vpop.permute.xlu0 %841
          %843 = vrot.lane.b32.xlu0 %v836, 124
          %v844 = vpop.permute.xlu0 %843
          %845 = vrot.lane.b32.xlu0 %v837, 124
          %v846 = vpop.permute.xlu0 %845
          %v850 = vadd.f32 %v831, %v842
          %v851 = vadd.f32 %v832, %v844
          %v852 = vadd.f32 %v833, %v846
          %v853 = vstv %s258
          %v854 = vmul.f32 %v294, %v853
          %v855 = vmul.f32 %v295, %v853
          %v856 = vmul.f32 %v296, %v853
          %860 = vrot.lane.b32.xlu0 %v854, 123
          %v861 = vpop.permute.xlu0 %860
          %862 = vrot.lane.b32.xlu0 %v855, 123
          %v863 = vpop.permute.xlu0 %862
          %864 = vrot.lane.b32.xlu0 %v856, 123
          %v865 = vpop.permute.xlu0 %864
          %v869 = vadd.f32 %v850, %v861
          %v870 = vadd.f32 %v851, %v863
          %v871 = vadd.f32 %v852, %v865
          %v872 = vstv %s259
          %v873 = vmul.f32 %v294, %v872
          %v874 = vmul.f32 %v295, %v872
          %v875 = vmul.f32 %v296, %v872
          %879 = vrot.lane.b32.xlu0 %v873, 122
          %v880 = vpop.permute.xlu0 %879
          %881 = vrot.lane.b32.xlu0 %v874, 122
          %v882 = vpop.permute.xlu0 %881
          %883 = vrot.lane.b32.xlu0 %v875, 122
          %v884 = vpop.permute.xlu0 %883
          %v888 = vadd.f32 %v869, %v880
          %v889 = vadd.f32 %v870, %v882
          %v890 = vadd.f32 %v871, %v884
          %vm894 = vcmask 1043456
          %v895 = vrot.slane %v888, 4
          %v896 = vrot.slane %v889, 4
          %v897 = vsel %vm894, %v895, %v896
          %v898 = vrot.slane %v890, 4
          %v899 = vsel %vm894, %v896, %v898
          %v902 = vadd.f32 %v771, %v897
          %v903 = vadd.f32 %v772, %v899
          %v904 = vstv %s260
          %v905 = vmul.f32 %v294, %v904
          %v906 = vmul.f32 %v295, %v904
          %v907 = vmul.f32 %v296, %v904
          %v908 = vstv %s261
          %v909 = vmul.f32 %v294, %v908
          %v910 = vmul.f32 %v295, %v908
          %v911 = vmul.f32 %v296, %v908
          %915 = vrot.lane.b32.xlu0 %v909, 127
          %v916 = vpop.permute.xlu0 %915
          %917 = vrot.lane.b32.xlu0 %v910, 127
          %v918 = vpop.permute.xlu0 %917
          %919 = vrot.lane.b32.xlu0 %v911, 127
          %v920 = vpop.permute.xlu0 %919
          %v924 = vadd.f32 %v905, %v916
          %v925 = vadd.f32 %v906, %v918
          %v926 = vadd.f32 %v907, %v920
          %v927 = vstv %s262
          %v928 = vmul.f32 %v294, %v927
          %v929 = vmul.f32 %v295, %v927
          %v930 = vmul.f32 %v296, %v927
          %934 = vrot.lane.b32.xlu0 %v928, 126
          %v935 = vpop.permute.xlu0 %934
          %936 = vrot.lane.b32.xlu0 %v929, 126
          %v937 = vpop.permute.xlu0 %936
          %938 = vrot.lane.b32.xlu0 %v930, 126
          %v939 = vpop.permute.xlu0 %938
          %v943 = vadd.f32 %v924, %v935
          %v944 = vadd.f32 %v925, %v937
          %v945 = vadd.f32 %v926, %v939
          %v946 = vstv %s263
          %v947 = vmul.f32 %v294, %v946
          %v948 = vmul.f32 %v295, %v946
          %v949 = vmul.f32 %v296, %v946
          %953 = vrot.lane.b32.xlu0 %v947, 125
          %v954 = vpop.permute.xlu0 %953
          %955 = vrot.lane.b32.xlu0 %v948, 125
          %v956 = vpop.permute.xlu0 %955
          %957 = vrot.lane.b32.xlu0 %v949, 125
          %v958 = vpop.permute.xlu0 %957
          %v962 = vadd.f32 %v943, %v954
          %v963 = vadd.f32 %v944, %v956
          %v964 = vadd.f32 %v945, %v958
          %v965 = vstv %s264
          %v966 = vmul.f32 %v294, %v965
          %v967 = vmul.f32 %v295, %v965
          %v968 = vmul.f32 %v296, %v965
          %972 = vrot.lane.b32.xlu0 %v966, 124
          %v973 = vpop.permute.xlu0 %972
          %974 = vrot.lane.b32.xlu0 %v967, 124
          %v975 = vpop.permute.xlu0 %974
          %976 = vrot.lane.b32.xlu0 %v968, 124
          %v977 = vpop.permute.xlu0 %976
          %v981 = vadd.f32 %v962, %v973
          %v982 = vadd.f32 %v963, %v975
          %v983 = vadd.f32 %v964, %v977
          %v984 = vstv %s265
          %v985 = vmul.f32 %v294, %v984
          %v986 = vmul.f32 %v295, %v984
          %v987 = vmul.f32 %v296, %v984
          %991 = vrot.lane.b32.xlu0 %v985, 123
          %v992 = vpop.permute.xlu0 %991
          %993 = vrot.lane.b32.xlu0 %v986, 123
          %v994 = vpop.permute.xlu0 %993
          %995 = vrot.lane.b32.xlu0 %v987, 123
          %v996 = vpop.permute.xlu0 %995
          %v1000 = vadd.f32 %v981, %v992
          %v1001 = vadd.f32 %v982, %v994
          %v1002 = vadd.f32 %v983, %v996
          %v1003 = vstv %s266
          %v1004 = vmul.f32 %v294, %v1003
          %v1005 = vmul.f32 %v295, %v1003
          %v1006 = vmul.f32 %v296, %v1003
          %1010 = vrot.lane.b32.xlu0 %v1004, 122
          %v1011 = vpop.permute.xlu0 %1010
          %1012 = vrot.lane.b32.xlu0 %v1005, 122
          %v1013 = vpop.permute.xlu0 %1012
          %1014 = vrot.lane.b32.xlu0 %v1006, 122
          %v1015 = vpop.permute.xlu0 %1014
          %v1019 = vadd.f32 %v1000, %v1011
          %v1020 = vadd.f32 %v1001, %v1013
          %v1021 = vadd.f32 %v1002, %v1015
          %vm1025 = vcmask 1042432
          %v1026 = vrot.slane %v1019, 5
          %v1027 = vrot.slane %v1020, 5
          %v1028 = vsel %vm1025, %v1026, %v1027
          %v1029 = vrot.slane %v1021, 5
          %v1030 = vsel %vm1025, %v1027, %v1029
          %v1033 = vadd.f32 %v902, %v1028
          %v1034 = vadd.f32 %v903, %v1030
          %v1035 = vstv %s267
          %v1036 = vmul.f32 %v294, %v1035
          %v1037 = vmul.f32 %v295, %v1035
          %v1038 = vmul.f32 %v296, %v1035
          %v1039 = vstv %s268
          %v1040 = vmul.f32 %v294, %v1039
          %v1041 = vmul.f32 %v295, %v1039
          %v1042 = vmul.f32 %v296, %v1039
          %1046 = vrot.lane.b32.xlu0 %v1040, 127
          %v1047 = vpop.permute.xlu0 %1046
          %1048 = vrot.lane.b32.xlu0 %v1041, 127
          %v1049 = vpop.permute.xlu0 %1048
          %1050 = vrot.lane.b32.xlu0 %v1042, 127
          %v1051 = vpop.permute.xlu0 %1050
          %v1055 = vadd.f32 %v1036, %v1047
          %v1056 = vadd.f32 %v1037, %v1049
          %v1057 = vadd.f32 %v1038, %v1051
          %v1058 = vstv %s269
          %v1059 = vmul.f32 %v294, %v1058
          %v1060 = vmul.f32 %v295, %v1058
          %v1061 = vmul.f32 %v296, %v1058
          %1065 = vrot.lane.b32.xlu0 %v1059, 126
          %v1066 = vpop.permute.xlu0 %1065
          %1067 = vrot.lane.b32.xlu0 %v1060, 126
          %v1068 = vpop.permute.xlu0 %1067
          %1069 = vrot.lane.b32.xlu0 %v1061, 126
          %v1070 = vpop.permute.xlu0 %1069
          %v1074 = vadd.f32 %v1055, %v1066
          %v1075 = vadd.f32 %v1056, %v1068
          %v1076 = vadd.f32 %v1057, %v1070
          %v1077 = vstv %s270
          %v1078 = vmul.f32 %v294, %v1077
          %v1079 = vmul.f32 %v295, %v1077
          %v1080 = vmul.f32 %v296, %v1077
          %1084 = vrot.lane.b32.xlu0 %v1078, 125
          %v1085 = vpop.permute.xlu0 %1084
          %1086 = vrot.lane.b32.xlu0 %v1079, 125
          %v1087 = vpop.permute.xlu0 %1086
          %1088 = vrot.lane.b32.xlu0 %v1080, 125
          %v1089 = vpop.permute.xlu0 %1088
          %v1093 = vadd.f32 %v1074, %v1085
          %v1094 = vadd.f32 %v1075, %v1087
          %v1095 = vadd.f32 %v1076, %v1089
          %v1096 = vstv %s271
          %v1097 = vmul.f32 %v294, %v1096
          %v1098 = vmul.f32 %v295, %v1096
          %v1099 = vmul.f32 %v296, %v1096
          %1103 = vrot.lane.b32.xlu0 %v1097, 124
          %v1104 = vpop.permute.xlu0 %1103
          %1105 = vrot.lane.b32.xlu0 %v1098, 124
          %v1106 = vpop.permute.xlu0 %1105
          %1107 = vrot.lane.b32.xlu0 %v1099, 124
          %v1108 = vpop.permute.xlu0 %1107
          %v1112 = vadd.f32 %v1093, %v1104
          %v1113 = vadd.f32 %v1094, %v1106
          %v1114 = vadd.f32 %v1095, %v1108
          %v1115 = vstv %s272
          %v1116 = vmul.f32 %v294, %v1115
          %v1117 = vmul.f32 %v295, %v1115
          %v1118 = vmul.f32 %v296, %v1115
          %1122 = vrot.lane.b32.xlu0 %v1116, 123
          %v1123 = vpop.permute.xlu0 %1122
          %1124 = vrot.lane.b32.xlu0 %v1117, 123
          %v1125 = vpop.permute.xlu0 %1124
          %1126 = vrot.lane.b32.xlu0 %v1118, 123
          %v1127 = vpop.permute.xlu0 %1126
          %v1131 = vadd.f32 %v1112, %v1123
          %v1132 = vadd.f32 %v1113, %v1125
          %v1133 = vadd.f32 %v1114, %v1127
          %v1134 = vstv %s273
          %v1135 = vmul.f32 %v294, %v1134
          %v1136 = vmul.f32 %v295, %v1134
          %v1137 = vmul.f32 %v296, %v1134
          %1141 = vrot.lane.b32.xlu0 %v1135, 122
          %v1142 = vpop.permute.xlu0 %1141
          %1143 = vrot.lane.b32.xlu0 %v1136, 122
          %v1144 = vpop.permute.xlu0 %1143
          %1145 = vrot.lane.b32.xlu0 %v1137, 122
          %v1146 = vpop.permute.xlu0 %1145
          %v1150 = vadd.f32 %v1131, %v1142
          %v1151 = vadd.f32 %v1132, %v1144
          %v1152 = vadd.f32 %v1133, %v1146
          %vm1156 = vcmask 1041408
          %v1157 = vrot.slane %v1150, 6
          %v1158 = vrot.slane %v1151, 6
          %v1159 = vsel %vm1156, %v1157, %v1158
          %v1160 = vrot.slane %v1152, 6
          %v1161 = vsel %vm1156, %v1158, %v1160
          %v1164 = vadd.f32 %v1033, %v1159
          %v1165 = vadd.f32 %v1034, %v1161
          %v1166 = vxor.u32 %v1164, 2147483648
          %v1167 = vxor.u32 %v1165, 2147483648
          %v1168 = vmul.f32 %v1166, 1.442695
          %v1169 = vpow.pop %v1168
          %v1170 = vmul.f32 %v1167, 1.442695
          %v1171 = vpow.pop %v1170
          %v1172 = vadd.f32 %v1169, 1.0
          %v1173 = vadd.f32 %v1171, 1.0
          %v1174 = vrcp.pop %v1172
          %v1175 = vmul.f32 1.0, %v1174
          %v1176 = vrcp.pop %v1173
          %v1177 = vmul.f32 1.0, %v1176
          %1178 = vst.msk [vmem:[%s190] sm:$0xff] %vm196, %v1175
          %1179 = vst.msk [vmem:[%s190 + $0x8] sm:$0xff] %vm196, %v1177
        $region48: #{tpu_custom_call.1} parent=27 // pred_fallthru
          _
        %s1180 = sand.u32 %s89, 1
        %s1181 = scalar_lea.sflag [#allocation6], %s1180
        %s1182 = sand.u32 %s89, 1
        %s1183 = smul.addr %s1182, 16
        %s1184 = scalar_lea.vmem [#allocation9], %s1183
        // Predicated region
        $region49: #{tpu_custom_call.1} parent=27 // pred_check
          %p1185 = pneg %p99
        $region50: #{tpu_custom_call.1} parent=27 // pred_check_branch
          %1187 = sbr.rel (%p1185) target = $region52
        $region51: #{tpu_custom_call.1} parent=27 // pred_region
          %s1189 = ssub.s32 256, 256
          %1190 = vsyncadd %s1181, %s1189
          %s1191 = smul.addr %s24, 2
          %s1192 = smul.addr %s1191, 128
          %s1193 = scalar_lea.hbm %s2, %s1192
          %s1194 = sshll.u32 %s1184, 4
          %s1195 = int_to_ptr.vmem [resolvable:$true] %s1194
          %1200 = dma.vmem_to_hbm [thread:$0]  %s1195, 256, %s1193, %s1181, 128, 128, 8
        $region52: #{tpu_custom_call.1} parent=27 // pred_fallthru
          _
      $region28: #{tpu_custom_call.1} parent=5 // pred_fallthru
        _
      %p1201 = scmp.le.s32.totalorder 2, %s15
      // Predicated region
      $region53: #{tpu_custom_call.1} parent=5 // pred_check
        %p1202 = pneg %p1201
      $region54: #{tpu_custom_call.1} parent=5 // pred_check_branch
        %1204 = sbr.rel (%p1202) target = $region56
      $region55: #{tpu_custom_call.1} parent=5 // pred_region
        %s1205 = ssub.s32 %s15, 2
        // Predicated region
        $region57: #{tpu_custom_call.1} parent=55 // pred_check
          %p1206 = pneg %p105
        $region58: #{tpu_custom_call.1} parent=55 // pred_check_branch
          %1208 = sbr.rel (%p1206) target = $region60
        $region59: #{tpu_custom_call.1} parent=55 // pred_region
          %s1209 = sand.u32 %s90, 1
          %s1210 = scalar_lea.sflag [#allocation6], %s1209
          %s1211 = sand.u32 %s90, 1
          %s1212 = smul.addr %s1211, 16
          %s1213 = scalar_lea.vmem [#allocation9], %s1212
          %1214 = dma.done %s1210, 256
        $region60: #{tpu_custom_call.1} parent=55 // pred_fallthru
          _
      $region56: #{tpu_custom_call.1} parent=5 // pred_fallthru
        _
    $region6: #{tpu_custom_call.1} parent=1 // loop_footer
      %s19 = sadd.s32 1, %s15
    $region7: #{tpu_custom_call.1} parent=1 // loop_footer_branch
      %14 = sbr.rel target = $region3
    $region8: #{tpu_custom_call.1} parent=1 // loop_exit
      _
    %1215 = vsyncpa [#allocation5], 1
    %s1216 = scalar_lea.sflag [#allocation5], 1
    %1217 = vsyncpa %s1216, 1
    %1218 = vsyncpa [#allocation6], 1
    %s1219 = scalar_lea.sflag [#allocation6], 1
    %1220 = vsyncpa %s1219, 1
    %1221 = vsyncpa [#allocation7], 1
    %s1222 = scalar_lea.sflag [#allocation7], 1
    %1223 = vsyncpa %s1222, 1

</llo_original>
